<compile_context>
chip_gen: v7x
topology: tpu7x:2x2x1
jax: 0.10.0
libtpu: 0.0.40
codegen_flags: <defaults>
</compile_context>

<pallas_src>
import functools

import jax
import jax.numpy as jnp
from jax.experimental import pallas as pl
from jax.experimental.pallas import tpu as pltpu

IN_DIM = 20
OUT_DIM = 4

# Max batch-tile: x tile is IN_DIM*tb*4 B = 5.25 MiB; double-buffered x + out
# + f32 temporaries stays well under the 32 MiB scoped-VMEM cap (v7x-safe).
MAX_TB = 65536
VMEM_LIMIT = 32 * 1024 * 1024


def _round_up(x, m):
    return ((x + m - 1) // m) * m


def _choose_tb(B):
    """Pick a batch tile (multiple of 128) from the static batch size."""
    b_pad = _round_up(max(B, 1), 128)
    if b_pad <= 8192:
        # Small batch: one grid step -- per-step pipeline overhead would
        # otherwise dominate this purely HBM-bound kernel.
        return b_pad
    # Large batch: big tiles amortize the fixed per-step cost, but keep the
    # grid length >= 2 so v7x's two TensorCores both get work.
    half = _round_up((B + 1) // 2, 512)
    return min(MAX_TB, half)


# ---------------------------------------------------------------------------
# Kernels
# ---------------------------------------------------------------------------

def logreg_fm_kernel(x_ref, w_ref, b_ref, o_ref):
    # Feature-major: x_ref (IN_DIM, tb), w_ref (4, IN_DIM), b_ref (4, 1),
    # o_ref (4, tb).  Batch rides the 128-lane axis -> lane-dense loads/stores.
    z = jnp.dot(w_ref[...], x_ref[...], preferred_element_type=jnp.float32)
    o_ref[...] = jax.nn.sigmoid(z + b_ref[...]).astype(o_ref.dtype)


def logreg_bm_kernel(x_ref, wt_ref, b_ref, o_ref):
    # Batch-major (PyTorch layout): x_ref (tb, IN_DIM), wt_ref (IN_DIM, 4),
    # b_ref (1, 4), o_ref (tb, 4).  No XLA transposes outside the kernel;
    # compute (MXU + sigmoid) is all slack under the HBM roofline anyway.
    z = jnp.dot(x_ref[...], wt_ref[...], preferred_element_type=jnp.float32)
    o_ref[...] = jax.nn.sigmoid(z + b_ref[...]).astype(o_ref.dtype)


# ---------------------------------------------------------------------------
# Wrappers
# ---------------------------------------------------------------------------

@functools.partial(jax.jit, static_argnames=("tb",))
def logreg_forward_fm(x_fm, weight, bias, *, tb=None):
    """Production path: feature-major x_fm [20, B] -> [4, B]."""
    in_dim, B = x_fm.shape
    assert in_dim == IN_DIM
    if tb is None:
        tb = _choose_tb(B)
    Bp = _round_up(B, tb)
    if Bp != B:
        x_fm = jnp.pad(x_fm, ((0, 0), (0, Bp - B)))
    w = weight.astype(jnp.float32)                        # (4, 20)
    b = bias.astype(jnp.float32).reshape(OUT_DIM, 1)      # (4, 1)

    out = pl.pallas_call(
        logreg_fm_kernel,
        out_shape=jax.ShapeDtypeStruct((OUT_DIM, Bp), jnp.float32),
        grid=(Bp // tb,),
        in_specs=[
            # Streamed activation tiles (double-buffered by the pipeline).
            pl.BlockSpec((IN_DIM, tb), lambda i: (0, i)),
            # Weight / bias: same block every step -> stay VMEM-resident.
            pl.BlockSpec((OUT_DIM, IN_DIM), lambda i: (0, 0)),
            pl.BlockSpec((OUT_DIM, 1), lambda i: (0, 0)),
        ],
        out_specs=pl.BlockSpec((OUT_DIM, tb), lambda i: (0, i)),
        compiler_params=pltpu.CompilerParams(
            dimension_semantics=("parallel",),
            vmem_limit_bytes=VMEM_LIMIT,
        ),
    )(x_fm, w, b)
    return out[:, :B]


@functools.partial(jax.jit, static_argnames=("tb",))
def logreg_forward(x, weight, bias, *, tb=None):
    """PyTorch-interface path: x [B, 20] -> [B, 4], layout handled in-kernel."""
    B, in_dim = x.shape
    assert in_dim == IN_DIM
    if tb is None:
        tb = _choose_tb(B)
    Bp = _round_up(B, tb)
    if Bp != B:
        x = jnp.pad(x, ((0, Bp - B), (0, 0)))
    w_t = weight.astype(jnp.float32).T                    # (20, 4), tiny, once per trace
    b_row = bias.astype(jnp.float32).reshape(1, OUT_DIM)  # (1, 4)

    out = pl.pallas_call(
        logreg_bm_kernel,
        out_shape=jax.ShapeDtypeStruct((Bp, OUT_DIM), jnp.float32),
        grid=(Bp // tb,),
        in_specs=[
            pl.BlockSpec((tb, IN_DIM), lambda i: (i, 0)),
            pl.BlockSpec((IN_DIM, OUT_DIM), lambda i: (0, 0)),
            pl.BlockSpec((1, OUT_DIM), lambda i: (0, 0)),
        ],
        out_specs=pl.BlockSpec((tb, OUT_DIM), lambda i: (i, 0)),
        compiler_params=pltpu.CompilerParams(
            dimension_semantics=("parallel",),
            vmem_limit_bytes=VMEM_LIMIT,
        ),
    )(x, w_t, b_row)
    return out[:B]


def logreg_reference(x, weight, bias):
    return jax.nn.sigmoid(x @ weight.T + bias)


# ---------------------------------------------------------------------------
# Demo / correctness check
# ---------------------------------------------------------------------------

if __name__ == "__main__":
    key = jax.random.PRNGKey(0)
    kx, kw, kb, kx2 = jax.random.split(key, 4)

    # Deterministic params (mimics nn.Linear's uniform(-1/sqrt(in), 1/sqrt(in)))
    bound = 1.0 / jnp.sqrt(jnp.float32(IN_DIM))
    weight = jax.random.uniform(kw, (OUT_DIM, IN_DIM), minval=-bound,
                                maxval=bound, dtype=jnp.float32)
    bias = jax.random.uniform(kb, (OUT_DIM,), minval=-bound, maxval=bound,
                              dtype=jnp.float32)

    # Small batch, PyTorch layout, single grid step (fast path).
    B = 16
    x = jax.random.normal(kx, (B, IN_DIM), dtype=jnp.float32)
    out = jax.block_until_ready(logreg_forward(x, weight, bias))
    ref = logreg_reference(x, weight, bias)
    assert out.shape == (B, OUT_DIM)
    assert jnp.allclose(out, ref, atol=1e-5, rtol=1e-5)

    # Feature-major production path on the same data.
    out_fm = jax.block_until_ready(logreg_forward_fm(x.T, weight, bias))
    assert out_fm.shape == (OUT_DIM, B)
    assert jnp.allclose(out_fm.T, ref, atol=1e-5, rtol=1e-5)

    # Ragged batch to exercise padding + slicing, with an explicit small tile
    # (forces a multi-step grid just to exercise the pipelined path).
    B2 = 300
    x2 = jax.random.normal(kx2, (B2, IN_DIM), dtype=jnp.float32)
    out2 = jax.block_until_ready(logreg_forward(x2, weight, bias, tb=128))
    ref2 = logreg_reference(x2, weight, bias)
    assert out2.shape == (B2, OUT_DIM)
    assert jnp.allclose(out2, ref2, atol=1e-5, rtol=1e-5)

    print("KERNEL_OK")
</pallas_src>

<mosaic_0001>
module attributes {stable_mosaic.version = 11 : i64} {
  func.func @logreg_bm_kernel(%arg0: i32, %arg1: memref<128x20xf32, #tpu.memory_space<vmem>>, %arg2: memref<20x4xf32, #tpu.memory_space<vmem>>, %arg3: memref<1x4xf32, #tpu.memory_space<vmem>>, %arg4: memref<128x4xf32, #tpu.memory_space<vmem>>) attributes {dimension_semantics = [#tpu.dimension_semantics<parallel>], iteration_bounds = array<i64: 1>, scalar_prefetch = 0 : i64, scratch_operands = 0 : i64, tpu.core_type = #tpu.core_type<tc>, window_params = [{transform_indices = @transform_0, window_bounds = array<i64: 128, 20>}, {pipeline_mode = #tpu.pipeline_mode<synchronous>, transform_indices = @transform_1, window_bounds = array<i64: 20, 4>}, {pipeline_mode = #tpu.pipeline_mode<synchronous>, transform_indices = @transform_2, window_bounds = array<i64: 1, 4>}, {transform_indices = @transform_3, window_bounds = array<i64: 128, 4>}]} {
    %c0 = arith.constant 0 : index
    %c0_0 = arith.constant 0 : index
    %0 = vector.load %arg1[%c0, %c0_0] : memref<128x20xf32, #tpu.memory_space<vmem>>, vector<128x20xf32>
    %c0_1 = arith.constant 0 : index
    %c0_2 = arith.constant 0 : index
    %1 = vector.load %arg2[%c0_1, %c0_2] : memref<20x4xf32, #tpu.memory_space<vmem>>, vector<20x4xf32>
    %cst = arith.constant dense<0.000000e+00> : vector<128x4xf32>
    %2 = tpu.matmul %0, %1, %cst {dimension_numbers = #tpu.dot_dimension_numbers<[1], [0], [0], [1], [0, 0, 1, 1], [], []>} : vector<128x20xf32>, vector<20x4xf32>, vector<128x4xf32> -> vector<128x4xf32>
    %c0_3 = arith.constant 0 : index
    %c0_4 = arith.constant 0 : index
    %3 = vector.load %arg3[%c0_3, %c0_4] : memref<1x4xf32, #tpu.memory_space<vmem>>, vector<1x4xf32>
    %4 = vector.broadcast %3 : vector<1x4xf32> to vector<128x4xf32>
    %5 = arith.addf %2, %4 : vector<128x4xf32>
    %6 = arith.negf %5 : vector<128x4xf32>
    %7 = math.exp %6 : vector<128x4xf32>
    %cst_5 = arith.constant 1.000000e+00 : f32
    %8 = vector.broadcast %cst_5 : f32 to vector<128x4xf32>
    %9 = arith.addf %8, %7 : vector<128x4xf32>
    %10 = arith.divf %8, %9 : vector<128x4xf32>
    %c0_6 = arith.constant 0 : index
    %c0_7 = arith.constant 0 : index
    %11 = vector.load %arg4[%c0_6, %c0_7] : memref<128x4xf32, #tpu.memory_space<vmem>>, vector<128x4xf32>
    tpu.vector_store %arg4[%c0_6, %c0_7], %10 {strides = array<i32>} : memref<128x4xf32, #tpu.memory_space<vmem>>, vector<128x4xf32>,
    return
  }
  func.func @transform_0(%arg0: i32) -> (i32, i32) {
    %c0_i32 = arith.constant 0 : i32
    %c0_i32_0 = arith.constant 0 : i32
    return %arg0, %c0_i32 : i32, i32
  }
  func.func @transform_1(%arg0: i32) -> (i32, i32) {
    %c0_i32 = arith.constant 0 : i32
    %c0_i32_0 = arith.constant 0 : i32
    %c0_i32_1 = arith.constant 0 : i32
    return %c0_i32, %c0_i32_0 : i32, i32
  }
  func.func @transform_2(%arg0: i32) -> (i32, i32) {
    %c0_i32 = arith.constant 0 : i32
    %c0_i32_0 = arith.constant 0 : i32
    %c0_i32_1 = arith.constant 0 : i32
    return %c0_i32, %c0_i32_0 : i32, i32
  }
  func.func @transform_3(%arg0: i32) -> (i32, i32) {
    %c0_i32 = arith.constant 0 : i32
    %c0_i32_0 = arith.constant 0 : i32
    return %arg0, %c0_i32 : i32, i32
  }
}

</mosaic_0001>

<llo_original>
// kernel: logreg_forward.1
$region0: #{logreg_forward.1}
  #allocation0 [shape = 'u32[]', space=smem, size = 0x4, offset = 0x4, fixed_abs, tag = 'smem constant byte address 0x4 - core index']
  #allocation1 [shape = 'u32[144,128]{1,0:T(1,128)}', space=vmem, size = 0x12000, scoped, tag = 'internal scratch']
  %s0 = inlined_call_operand.vmem [shape: f32[128,20], index: 0, kind: input, shape index: {}]
  %s1 = inlined_call_operand.vmem [shape: f32[20,4], index: 1, kind: input, shape index: {}]
  %s2 = inlined_call_operand.vmem [shape: f32[1,4], index: 2, kind: input, shape index: {}]
  %s3 = inlined_call_operand.vmem [shape: f32[128,4], index: 3, kind: output, shape index: {}]
  %s4 = sld [smem:[#allocation0]]
  $region22: #{logreg_forward.1} parent=0
    _
  %s6 = ssub.s32 1, %s4
  %s7 = scalar_select 0, %s6, %s4
  // Predicated region
  $region2: #{logreg_forward.1} parent=0 // pred_check
    _
  $region3: #{logreg_forward.1} parent=0 // pred_check_branch
    %9 = sbr.rel (0) target = $region5
  $region4: #{logreg_forward.1} parent=0 // pred_region
    _
  $region5: #{logreg_forward.1} parent=0 // pred_fallthru
    _
  // Predicated region
  $region6: #{logreg_forward.1} parent=0 // pred_check
    _
  $region7: #{logreg_forward.1} parent=0 // pred_check_branch
    %11 = sbr.rel (0) target = $region9
  $region8: #{logreg_forward.1} parent=0 // pred_region
    _
  $region9: #{logreg_forward.1} parent=0 // pred_fallthru
    _
  // Predicated region
  $region10: #{logreg_forward.1} parent=0 // pred_check
    _
  $region11: #{logreg_forward.1} parent=0 // pred_check_branch
    %13 = sbr.rel (0) target = $region13
  $region12: #{logreg_forward.1} parent=0 // pred_region
    _
  $region13: #{logreg_forward.1} parent=0 // pred_fallthru
    _
  %v14 = vld [vmem:[%s0] sm:$0xff]
  %v15 = vld [vmem:[%s0 + $0x8] sm:$0xff]
  %v16 = vld [vmem:[%s0 + $0x10] sm:$0xff]
  %v17 = vld [vmem:[%s0 + $0x18] sm:$0xff]
  %v18 = vld [vmem:[%s0 + $0x20] sm:$0xff]
  %v19 = vld [vmem:[%s0 + $0x28] sm:$0xff]
  %v20 = vld [vmem:[%s0 + $0x30] sm:$0xff]
  %v21 = vld [vmem:[%s0 + $0x38] sm:$0xff]
  %v22 = vld [vmem:[%s0 + $0x40] sm:$0xff]
  %v23 = vld [vmem:[%s0 + $0x48] sm:$0xff]
  %v24 = vld [vmem:[%s0 + $0x50] sm:$0xff]
  %v25 = vld [vmem:[%s0 + $0x58] sm:$0xff]
  %v26 = vld [vmem:[%s0 + $0x60] sm:$0xff]
  %v27 = vld [vmem:[%s0 + $0x68] sm:$0xff]
  %v28 = vld [vmem:[%s0 + $0x70] sm:$0xff]
  %v29 = vld [vmem:[%s0 + $0x78] sm:$0xff]
  %v30 = vld [vmem:[%s1] sm:$0xff]
  %v31 = vld [vmem:[%s1 + $0x8] sm:$0xff]
  %v32 = vld [vmem:[%s1 + $0x10] sm:$0xf]
  %v33 = vld [vmem:[%s2] sm:$0x1]
  %v35 = vlaneseq
  %v36 = vshrl.u32 %v35, 7
  %v37 = vsub.s32 0, %v36
  %v38 = vrot.slane %v33, %v37
  %vm40 = vcmask 162816
  %v42 = vsel %vm40, %v14, 0
  %v45 = vsel %vm40, %v15, 0
  %v48 = vsel %vm40, %v16, 0
  %v51 = vsel %vm40, %v17, 0
  %v54 = vsel %vm40, %v18, 0
  %v57 = vsel %vm40, %v19, 0
  %v60 = vsel %vm40, %v20, 0
  %v63 = vsel %vm40, %v21, 0
  %v66 = vsel %vm40, %v22, 0
  %v69 = vsel %vm40, %v23, 0
  %v72 = vsel %vm40, %v24, 0
  %v75 = vsel %vm40, %v25, 0
  %v78 = vsel %vm40, %v26, 0
  %v81 = vsel %vm40, %v27, 0
  %v84 = vsel %vm40, %v28, 0
  %v87 = vsel %vm40, %v29, 0
  %vm89 = vcmask 1043456
  %v91 = vsel %vm89, %v32, 0
  %93 = vmatprep.subr.mxu0 0.0
  %94 = vmatpush1.msra.mxu0 %v30
  %95 = vmatprep.subr.mxu0 0.0
  %96 = vmatpush1.msra.mxu0 %v31
  %97 = vmatprep.subr.mxu0 0.0
  %98 = vmatpush1.msra.mxu0 %v91
  %99 = vmatprep.subr.mxu0 0.0
  %100 = vmatpush1.msra.mxu0 0.0
  %101 = vmatprep.subr.mxu0 0.0
  %102 = vmatpush1.msra.mxu0 0.0
  %103 = vmatprep.subr.mxu0 0.0
  %104 = vmatpush1.msra.mxu0 0.0
  %105 = vmatprep.subr.mxu0 0.0
  %106 = vmatpush1.msra.mxu0 0.0
  %107 = vmatprep.subr.mxu0 0.0
  %108 = vmatpush1.msra.mxu0 0.0
  %109 = vmatprep.subr.mxu0 0.0
  %110 = vmatpush1.msra.mxu0 0.0
  %111 = vmatprep.subr.mxu0 0.0
  %112 = vmatpush1.msra.mxu0 0.0
  %113 = vmatprep.subr.mxu0 0.0
  %114 = vmatpush1.msra.mxu0 0.0
  %115 = vmatprep.subr.mxu0 0.0
  %116 = vmatpush1.msra.mxu0 0.0
  %117 = vmatprep.subr.mxu0 0.0
  %118 = vmatpush1.msra.mxu0 0.0
  %119 = vmatprep.subr.mxu0 0.0
  %120 = vmatpush1.msra.mxu0 0.0
  %121 = vmatprep.subr.mxu0 0.0
  %122 = vmatpush1.msra.mxu0 0.0
  %123 = vmatprep.subr.mxu0 0.0
  %124 = vmatpush1.msra.mxu0 0.0
  %125 = vmatprep.subr.mxu0 0.0
  %126 = vmatpush1.msra.mxu0 0.0
  %127 = vmatprep.subr.mxu0 0.0
  %128 = vmatpush1.msra.mxu0 0.0
  %129 = vmatprep.subr.mxu0 0.0
  %130 = vmatpush1.msra.mxu0 0.0
  %131 = vmatprep.subr.mxu0 0.0
  %132 = vmatpush1.msra.mxu0 0.0
  %133 = vmatprep.subr.mxu0 0.0
  %134 = vmatpush1.msra.mxu0 0.0
  %135 = vmatprep.subr.mxu0 0.0
  %136 = vmatpush1.msra.mxu0 0.0
  %137 = vmatprep.subr.mxu0 0.0
  %138 = vmatpush1.msra.mxu0 0.0
  %139 = vmatprep.subr.mxu0 0.0
  %140 = vmatpush1.msra.mxu0 0.0
  %141 = vmatprep.subr.mxu0 0.0
  %142 = vmatpush1.msra.mxu0 0.0
  %143 = vmatprep.subr.mxu0 0.0
  %144 = vmatpush1.msra.mxu0 0.0
  %145 = vmatprep.subr.mxu0 0.0
  %146 = vmatpush1.msra.mxu0 0.0
  %147 = vmatprep.subr.mxu0 0.0
  %148 = vmatpush1.msra.mxu0 0.0
  %149 = vmatprep.subr.mxu0 0.0
  %150 = vmatpush1.msra.mxu0 0.0
  %151 = vmatprep.subr.mxu0 0.0
  %152 = vmatpush1.msra.mxu0 0.0
  %153 = vmatprep.subr.mxu0 0.0
  %154 = vmatpush1.msra.mxu0 0.0
  %155 = vmatprep.subr.mxu0 0.0
  %156 = vmatpush1.msra.mxu0 0.0
  %157 = vmatprep.mubr.f32.mxu0 0.0
  %158 = vmatmul.mubr.f32.gmra.mrb[0].mxu0 %v42
  %v159 = vpop.f32.mrb[0].mxu0
  %v160 = vadd.f32 %v38, %v159
  %v161 = vpop.f32.mrb[0].mxu0
  %162 = vmatprep.mubr.f32.mxu0 0.0
  %163 = vmatmul.mubr.f32.gmra.mrb[0].mxu0 %v45
  %v164 = vpop.f32.mrb[0].mxu0
  %v165 = vadd.f32 %v38, %v164
  %v166 = vpop.f32.mrb[0].mxu0
  %167 = vmatprep.mubr.f32.mxu0 0.0
  %168 = vmatmul.mubr.f32.gmra.mrb[0].mxu0 %v48
  %v169 = vpop.f32.mrb[0].mxu0
  %v170 = vadd.f32 %v38, %v169
  %v171 = vpop.f32.mrb[0].mxu0
  %172 = vmatprep.mubr.f32.mxu0 0.0
  %173 = vmatmul.mubr.f32.gmra.mrb[0].mxu0 %v51
  %v174 = vpop.f32.mrb[0].mxu0
  %v175 = vadd.f32 %v38, %v174
  %v176 = vpop.f32.mrb[0].mxu0
  %177 = vmatprep.mubr.f32.mxu0 0.0
  %178 = vmatmul.mubr.f32.gmra.mrb[0].mxu0 %v54
  %v179 = vpop.f32.mrb[0].mxu0
  %v180 = vadd.f32 %v38, %v179
  %v181 = vpop.f32.mrb[0].mxu0
  %182 = vmatprep.mubr.f32.mxu0 0.0
  %183 = vmatmul.mubr.f32.gmra.mrb[0].mxu0 %v57
  %v184 = vpop.f32.mrb[0].mxu0
  %v185 = vadd.f32 %v38, %v184
  %v186 = vpop.f32.mrb[0].mxu0
  %187 = vmatprep.mubr.f32.mxu0 0.0
  %188 = vmatmul.mubr.f32.gmra.mrb[0].mxu0 %v60
  %v189 = vpop.f32.mrb[0].mxu0
  %v190 = vadd.f32 %v38, %v189
  %v191 = vpop.f32.mrb[0].mxu0
  %192 = vmatprep.mubr.f32.mxu0 0.0
  %193 = vmatmul.mubr.f32.gmra.mrb[0].mxu0 %v63
  %v194 = vpop.f32.mrb[0].mxu0
  %v195 = vadd.f32 %v38, %v194
  %v196 = vpop.f32.mrb[0].mxu0
  %197 = vmatprep.mubr.f32.mxu0 0.0
  %198 = vmatmul.mubr.f32.gmra.mrb[0].mxu0 %v66
  %v199 = vpop.f32.mrb[0].mxu0
  %v200 = vadd.f32 %v38, %v199
  %v201 = vpop.f32.mrb[0].mxu0
  %202 = vmatprep.mubr.f32.mxu0 0.0
  %203 = vmatmul.mubr.f32.gmra.mrb[0].mxu0 %v69
  %v204 = vpop.f32.mrb[0].mxu0
  %v205 = vadd.f32 %v38, %v204
  %v206 = vpop.f32.mrb[0].mxu0
  %207 = vmatprep.mubr.f32.mxu0 0.0
  %208 = vmatmul.mubr.f32.gmra.mrb[0].mxu0 %v72
  %v209 = vpop.f32.mrb[0].mxu0
  %v210 = vadd.f32 %v38, %v209
  %v211 = vpop.f32.mrb[0].mxu0
  %212 = vmatprep.mubr.f32.mxu0 0.0
  %213 = vmatmul.mubr.f32.gmra.mrb[0].mxu0 %v75
  %v214 = vpop.f32.mrb[0].mxu0
  %v215 = vadd.f32 %v38, %v214
  %v216 = vpop.f32.mrb[0].mxu0
  %217 = vmatprep.mubr.f32.mxu0 0.0
  %218 = vmatmul.mubr.f32.gmra.mrb[0].mxu0 %v78
  %v219 = vpop.f32.mrb[0].mxu0
  %v220 = vadd.f32 %v38, %v219
  %v221 = vpop.f32.mrb[0].mxu0
  %222 = vmatprep.mubr.f32.mxu0 0.0
  %223 = vmatmul.mubr.f32.gmra.mrb[0].mxu0 %v81
  %v224 = vpop.f32.mrb[0].mxu0
  %v225 = vadd.f32 %v38, %v224
  %v226 = vpop.f32.mrb[0].mxu0
  %227 = vmatprep.mubr.f32.mxu0 0.0
  %228 = vmatmul.mubr.f32.gmra.mrb[0].mxu0 %v84
  %v229 = vpop.f32.mrb[0].mxu0
  %v230 = vadd.f32 %v38, %v229
  %v231 = vpop.f32.mrb[0].mxu0
  %232 = vmatprep.mubr.f32.mxu0 0.0
  %233 = vmatmul.mubr.f32.gmra.mrb[0].mxu0 %v87
  %v234 = vpop.f32.mrb[0].mxu0
  %v235 = vadd.f32 %v38, %v234
  %v236 = vpop.f32.mrb[0].mxu0
  %237 = vdwg.mxu0
  %v238 = vxor.u32 %v160, 2147483648
  %v239 = vxor.u32 %v165, 2147483648
  %v240 = vxor.u32 %v170, 2147483648
  %v241 = vxor.u32 %v175, 2147483648
  %v242 = vxor.u32 %v180, 2147483648
  %v243 = vxor.u32 %v185, 2147483648
  %v244 = vxor.u32 %v190, 2147483648
  %v245 = vxor.u32 %v195, 2147483648
  %v246 = vxor.u32 %v200, 2147483648
  %v247 = vxor.u32 %v205, 2147483648
  %v248 = vxor.u32 %v210, 2147483648
  %v249 = vxor.u32 %v215, 2147483648
  %v250 = vxor.u32 %v220, 2147483648
  %v251 = vxor.u32 %v225, 2147483648
  %v252 = vxor.u32 %v230, 2147483648
  %v253 = vxor.u32 %v235, 2147483648
  %v254 = vmul.f32 %v238, 1.442695
  %v255 = vpow.pop %v254
  %v256 = vmul.f32 %v239, 1.442695
  %v257 = vpow.pop %v256
  %v258 = vmul.f32 %v240, 1.442695
  %v259 = vpow.pop %v258
  %v260 = vmul.f32 %v241, 1.442695
  %v261 = vpow.pop %v260
  %v262 = vmul.f32 %v242, 1.442695
  %v263 = vpow.pop %v262
  %v264 = vmul.f32 %v243, 1.442695
  %v265 = vpow.pop %v264
  %v266 = vmul.f32 %v244, 1.442695
  %v267 = vpow.pop %v266
  %v268 = vmul.f32 %v245, 1.442695
  %v269 = vpow.pop %v268
  %v270 = vmul.f32 %v246, 1.442695
  %v271 = vpow.pop %v270
  %v272 = vmul.f32 %v247, 1.442695
  %v273 = vpow.pop %v272
  %v274 = vmul.f32 %v248, 1.442695
  %v275 = vpow.pop %v274
  %v276 = vmul.f32 %v249, 1.442695
  %v277 = vpow.pop %v276
  %v278 = vmul.f32 %v250, 1.442695
  %v279 = vpow.pop %v278
  %v280 = vmul.f32 %v251, 1.442695
  %v281 = vpow.pop %v280
  %v282 = vmul.f32 %v252, 1.442695
  %v283 = vpow.pop %v282
  %v284 = vmul.f32 %v253, 1.442695
  %v285 = vpow.pop %v284
  %v286 = vadd.f32 %v255, 1.0
  %v287 = vadd.f32 %v257, 1.0
  %v288 = vadd.f32 %v259, 1.0
  %v289 = vadd.f32 %v261, 1.0
  %v290 = vadd.f32 %v263, 1.0
  %v291 = vadd.f32 %v265, 1.0
  %v292 = vadd.f32 %v267, 1.0
  %v293 = vadd.f32 %v269, 1.0
  %v294 = vadd.f32 %v271, 1.0
  %v295 = vadd.f32 %v273, 1.0
  %v296 = vadd.f32 %v275, 1.0
  %v297 = vadd.f32 %v277, 1.0
  %v298 = vadd.f32 %v279, 1.0
  %v299 = vadd.f32 %v281, 1.0
  %v300 = vadd.f32 %v283, 1.0
  %v301 = vadd.f32 %v285, 1.0
  %v302 = vrcp.pop %v286
  %v303 = vmul.f32 1.0, %v302
  %v304 = vrcp.pop %v287
  %v305 = vmul.f32 1.0, %v304
  %v306 = vrcp.pop %v288
  %v307 = vmul.f32 1.0, %v306
  %v308 = vrcp.pop %v289
  %v309 = vmul.f32 1.0, %v308
  %v310 = vrcp.pop %v290
  %v311 = vmul.f32 1.0, %v310
  %v312 = vrcp.pop %v291
  %v313 = vmul.f32 1.0, %v312
  %v314 = vrcp.pop %v292
  %v315 = vmul.f32 1.0, %v314
  %v316 = vrcp.pop %v293
  %v317 = vmul.f32 1.0, %v316
  %v318 = vrcp.pop %v294
  %v319 = vmul.f32 1.0, %v318
  %v320 = vrcp.pop %v295
  %v321 = vmul.f32 1.0, %v320
  %v322 = vrcp.pop %v296
  %v323 = vmul.f32 1.0, %v322
  %v324 = vrcp.pop %v297
  %v325 = vmul.f32 1.0, %v324
  %v326 = vrcp.pop %v298
  %v327 = vmul.f32 1.0, %v326
  %v328 = vrcp.pop %v299
  %v329 = vmul.f32 1.0, %v328
  %v330 = vrcp.pop %v300
  %v331 = vmul.f32 1.0, %v330
  %v332 = vrcp.pop %v301
  %v333 = vmul.f32 1.0, %v332
  %vm334 = vcmask 31744
  %335 = vst.msk [vmem:[%s3] sm:$0xff] %vm334, %v303
  %336 = vst.msk [vmem:[%s3 + $0x8] sm:$0xff] %vm334, %v305
  %337 = vst.msk [vmem:[%s3 + $0x10] sm:$0xff] %vm334, %v307
  %338 = vst.msk [vmem:[%s3 + $0x18] sm:$0xff] %vm334, %v309
  %339 = vst.msk [vmem:[%s3 + $0x20] sm:$0xff] %vm334, %v311
  %340 = vst.msk [vmem:[%s3 + $0x28] sm:$0xff] %vm334, %v313
  %341 = vst.msk [vmem:[%s3 + $0x30] sm:$0xff] %vm334, %v315
  %342 = vst.msk [vmem:[%s3 + $0x38] sm:$0xff] %vm334, %v317
  %343 = vst.msk [vmem:[%s3 + $0x40] sm:$0xff] %vm334, %v319
  %344 = vst.msk [vmem:[%s3 + $0x48] sm:$0xff] %vm334, %v321
  %345 = vst.msk [vmem:[%s3 + $0x50] sm:$0xff] %vm334, %v323
  %346 = vst.msk [vmem:[%s3 + $0x58] sm:$0xff] %vm334, %v325
  %347 = vst.msk [vmem:[%s3 + $0x60] sm:$0xff] %vm334, %v327
  %348 = vst.msk [vmem:[%s3 + $0x68] sm:$0xff] %vm334, %v329
  %349 = vst.msk [vmem:[%s3 + $0x70] sm:$0xff] %vm334, %v331
  %350 = vst.msk [vmem:[%s3 + $0x78] sm:$0xff] %vm334, %v333
  // Predicated region
  $region14: #{logreg_forward.1} parent=0 // pred_check
    _
  $region15: #{logreg_forward.1} parent=0 // pred_check_branch
    %352 = sbr.rel (0) target = $region17
  $region16: #{logreg_forward.1} parent=0 // pred_region
    _
  $region17: #{logreg_forward.1} parent=0 // pred_fallthru
    _
  // Predicated region
  $region18: #{logreg_forward.1} parent=0 // pred_check
    _
  $region19: #{logreg_forward.1} parent=0 // pred_check_branch
    %354 = sbr.rel (0) target = $region21
  $region20: #{logreg_forward.1} parent=0 // pred_region
    _
  $region21: #{logreg_forward.1} parent=0 // pred_fallthru
    _

</llo_original>
